<compile_context>
chip_gen: v7x
topology: tpu7x:2x2x1
jax: 0.10.0
libtpu: 0.0.40
codegen_flags: <defaults>
</compile_context>

<pallas_src>
import numpy as np
import jax
import jax.numpy as jnp
from jax.experimental import pallas as pl
from jax.experimental.pallas import tpu as pltpu


# ----------------------------- fused conv-block kernel ----------------------

def make_block_kernel(H, Ho, cout, pooled):
    """Fused Conv3x3(pad=1) [+ MaxPool2x2] + ReLU + Dropout(id) + BN(eval).

    Per grid step (one image):
      x_ref     : (1, H+2, n_in_cols)  bf16, rows 0 / H+1 are zero padding.
      wband_ref : (3, n_in_cols, n_out_cols) bf16 banded weights (one band per ky).
      brow/srow/trow : (1, n_out_cols) f32 bias / BN-scale / BN-shift, tiled per pixel.
      o_ref     : (1, Ho+2, n_out_cols) bf16, row-padded, (w, co)-flattened columns.
    """
    def kernel(x_ref, wband_ref, brow_ref, srow_ref, trow_ref, o_ref):
        # One aligned load of the whole padded image, up-cast to f32 in VMEM.
        xf = x_ref[0].astype(jnp.float32)                       # (H+2, n_in_cols)

        # conv: out[h] = sum_ky x[h + ky] @ band[ky]   (zero rows give the padding)
        acc = jnp.dot(xf[0:H, :], wband_ref[0].astype(jnp.float32),
                      preferred_element_type=jnp.float32)
        acc = acc + jnp.dot(xf[1:H + 1, :], wband_ref[1].astype(jnp.float32),
                            preferred_element_type=jnp.float32)
        acc = acc + jnp.dot(xf[2:H + 2, :], wband_ref[2].astype(jnp.float32),
                            preferred_element_type=jnp.float32)
        acc = acc + brow_ref[...]                               # conv bias

        if pooled:
            # 2x2 max-pool fused in VMEM.  Rows: pair-max + repack.
            rows = [jnp.maximum(acc[2 * i:2 * i + 1, :], acc[2 * i + 1:2 * i + 2, :])
                    for i in range(Ho)]
            rp = jnp.concatenate(rows, axis=0) if Ho > 1 else rows[0]
            # Columns: compare with the neighbouring co-block (shift by cout lanes).
            # Result stays "uncompacted": valid data at columns 2*wo*cout + co; the
            # stale columns are never referenced by downstream (banded) weights.
            shifted = jnp.concatenate([rp[:, cout:], rp[:, :cout]], axis=1)
            act = jnp.maximum(rp, shifted)
        else:
            act = acc

        act = jnp.maximum(act, 0.0)                             # ReLU (Dropout: id)
        act = act * srow_ref[...] + trow_ref[...]               # BatchNorm2d (eval)

        o_ref[...] = jnp.zeros_like(o_ref)                      # zero row padding
        o_ref[0, 1:Ho + 1, :] = act.astype(o_ref.dtype)

    return kernel


def conv_block(x, blk, meta):
    N = x.shape[0]
    H, n_in = meta["H"], meta["n_in_cols"]
    Ho, n_out = meta["Ho"], meta["n_out_cols"]
    kernel = make_block_kernel(H, Ho, meta["cout"], meta["pooled"])
    return pl.pallas_call(
        kernel,
        out_shape=jax.ShapeDtypeStruct((N, Ho + 2, n_out), jnp.bfloat16),
        grid=(N,),
        in_specs=[
            pl.BlockSpec((1, H + 2, n_in), lambda n: (n, 0, 0)),
            pl.BlockSpec((3, n_in, n_out), lambda n: (0, 0, 0)),
            pl.BlockSpec((1, n_out), lambda n: (0, 0)),
            pl.BlockSpec((1, n_out), lambda n: (0, 0)),
            pl.BlockSpec((1, n_out), lambda n: (0, 0)),
        ],
        out_specs=pl.BlockSpec((1, Ho + 2, n_out), lambda n: (n, 0, 0)),
        compiler_params=pltpu.CompilerParams(dimension_semantics=("parallel",)),
    )(x, blk["wband"], blk["brow"], blk["srow"], blk["trow"])


# ------------------------------ fused head kernel ---------------------------

def make_head_kernel(L):
    def kernel(h_ref, w_ref, b_ref, eps_ref, z_ref, mu_ref, ls_ref):
        # Single bf16 MXU matmul for both heads (columns [0:L] = mu, [L:2L] = log_var).
        acc = jnp.dot(h_ref[...], w_ref[...],
                      preferred_element_type=jnp.float32) + b_ref[...]
        mu = acc[:, :L]
        pre = acc[:, L:]
        # stable softplus
        log_sigma = jnp.maximum(pre, 0.0) + jnp.log1p(jnp.exp(-jnp.abs(pre)))
        sigma = 1.0 + jnp.exp(pre)        # == exp(softplus(pre)); one fewer EUP exp
        z_ref[...] = mu + sigma * eps_ref[...]
        mu_ref[...] = mu
        ls_ref[...] = log_sigma
    return kernel


def _row_tile(n, target=128):
    if n % 8 != 0:
        return n
    t = min(target, n)
    while n % t != 0 or t % 8 != 0:
        t -= 8
    return t


def head(h_flat, w_exp, b_cat, eps, L):
    N, D = h_flat.shape
    TN = _row_tile(N)
    return pl.pallas_call(
        make_head_kernel(L),
        out_shape=(jax.ShapeDtypeStruct((N, L), jnp.float32),) * 3,
        grid=(N // TN,),
        in_specs=[
            pl.BlockSpec((TN, D), lambda i: (i, 0)),
            pl.BlockSpec((D, 2 * L), lambda i: (0, 0)),
            pl.BlockSpec((1, 2 * L), lambda i: (0, 0)),
            pl.BlockSpec((TN, L), lambda i: (i, 0)),
        ],
        out_specs=(pl.BlockSpec((TN, L), lambda i: (i, 0)),) * 3,
        compiler_params=pltpu.CompilerParams(dimension_semantics=("parallel",)),
    )(h_flat, w_exp, b_cat, eps)


# ------------------------------ parameter building --------------------------

def init_params(key, num_var, num_latent, num_neurons, maxpool_indices, bn_eps=1e-5):
    """Builds banded conv weights + expanded head weight for the kernel layout.

    Activation layout between blocks: per image a (Hvalid+2, ncols) slab; rows 1..H
    hold the image, rows 0 / H+1 are zeros (the conv's vertical padding).  Valid
    pixel (w, c) lives at column w*s + c (s = C for compact, 2*C after a fused pool);
    other columns are ignored by construction of the next banded / head weight.
    """
    pooled_set = set(maxpool_indices)
    num_units = [num_var] + list(num_neurons)

    # layout descriptor of the activation entering the current block
    H, W, C, s, ncols = 28, 28, num_var, num_var, 28 * num_var

    blocks, metas = [], []
    for li, (cin, cout) in enumerate(zip(num_units[:-1], num_units[1:])):
        assert cin == C
        key, kw, kb = jax.random.split(key, 3)
        bound = 1.0 / np.sqrt(cin * 9)
        wc = np.asarray(jax.random.uniform(kw, (3, 3, cin, cout), jnp.float32,
                                           -bound, bound))
        bias = np.asarray(jax.random.uniform(kb, (cout,), jnp.float32, -bound, bound))

        # banded weight: folds the kx taps, channel mixing, horizontal zero-padding
        # and the input column spacing into (3, ncols_in, ncols_out)
        n_out_cols = W * cout
        wband = np.zeros((3, ncols, n_out_cols), np.float32)
        for ky in range(3):
            for kx in range(3):
                for wo in range(W):
                    wi = wo + kx - 1
                    if 0 <= wi < W:
                        wband[ky, wi * s:wi * s + cin,
                              wo * cout:wo * cout + cout] = wc[ky, kx]

        # BatchNorm2d eval folding (init: gamma=1, beta=0, mean=0, var=1)
        gamma = np.ones(cout, np.float32)
        beta = np.zeros(cout, np.float32)
        rmean = np.zeros(cout, np.float32)
        rvar = np.ones(cout, np.float32)
        scale = gamma / np.sqrt(rvar + bn_eps)
        shift = beta - rmean * scale

        pooled = li in pooled_set
        Ho = H // 2 if pooled else H

        blocks.append(dict(
            wband=jnp.asarray(wband, jnp.bfloat16),
            brow=jnp.asarray(np.tile(bias, W)[None, :], jnp.float32),
            srow=jnp.asarray(np.tile(scale, W)[None, :], jnp.float32),
            trow=jnp.asarray(np.tile(shift, W)[None, :], jnp.float32),
        ))
        metas.append(dict(H=H, Ho=Ho, n_in_cols=ncols, n_out_cols=n_out_cols,
                          cout=cout, pooled=pooled))

        # this block's output layout = next block's input layout
        if pooled:
            H, W, C, s, ncols = Ho, W // 2, cout, 2 * cout, n_out_cols
        else:
            H, W, C, s, ncols = Ho, W, cout, cout, n_out_cols

    # head: mu / log_var Linear layers, concatenated, then scattered into the
    # kernel's row-padded / uncompacted layout so the PyTorch (c, h, w) flatten is
    # free (no runtime transpose / compaction).
    dims = [28, 14, 7, 3, 1]
    Hf, Wf, Cf = H, W, C
    D = dims[len(maxpool_indices)] ** 2 * num_neurons[-1]
    assert D == Hf * Wf * Cf, "layout bookkeeping mismatch"
    L = num_latent
    key, k1, k2, k3, k4 = jax.random.split(key, 5)
    lb = 1.0 / np.sqrt(D)
    mu_w = np.asarray(jax.random.uniform(k1, (D, L), jnp.float32, -lb, lb))
    mu_b = np.asarray(jax.random.uniform(k2, (L,), jnp.float32, -lb, lb))
    lv_w = np.asarray(jax.random.uniform(k3, (D, L), jnp.float32, -lb, lb))
    lv_b = np.asarray(jax.random.uniform(k4, (L,), jnp.float32, -lb, lb))
    wcat = np.concatenate([mu_w, lv_w], axis=1)            # (D, 2L)
    bcat = np.concatenate([mu_b, lv_b])[None, :]           # (1, 2L)

    Rf = Hf + 2
    w_exp = np.zeros((Rf * ncols, 2 * L), np.float32)
    for hh in range(Hf):
        for ww in range(Wf):
            dst = (hh + 1) * ncols + ww * s
            w_exp[dst:dst + Cf, :] = wcat[(hh * Wf + ww)::(Hf * Wf), :]

    return dict(blocks=blocks, metas=metas,
                head_w=jnp.asarray(w_exp, jnp.bfloat16),
                head_b=jnp.asarray(bcat, jnp.float32),
                head_dims=(Rf, ncols), num_latent=L)


# ------------------------------ forward pass ---------------------------------

def categorical_encoder_forward(x_nchw, params, eps):
    """x_nchw: [N, num_var, 28, 28] float32 (PyTorch NCHW convention)."""
    # Only glue in the whole forward: put the raw input into the kernel layout
    # (NHWC, (w,c)-flattened columns, one zero row of padding top/bottom, bf16).
    N, Cin, H, W = x_nchw.shape
    h = jnp.transpose(x_nchw, (0, 2, 3, 1)).astype(jnp.bfloat16)
    h = h.reshape(N, H, W * Cin)
    h = jnp.pad(h, ((0, 0), (1, 1), (0, 0)))

    for blk, meta in zip(params["blocks"], params["metas"]):
        h = conv_block(h, blk, meta)            # one fused Pallas kernel per block

    Rf, ncols = params["head_dims"]
    h_flat = h.reshape(N, Rf * ncols)           # contiguous dims -> free reshape
    return head(h_flat, params["head_w"], params["head_b"],
                eps, params["num_latent"])      # one fused Pallas head kernel


if __name__ == "__main__":
    # Small config consistent with the module (spatial is hard-coded to 28x28).
    num_var = 4
    num_latent = 8
    num_neurons = [8, 16]
    maxpool_indices = [0, 1]   # pool after both conv blocks -> final spatial 7x7
    batch = 2

    key = jax.random.PRNGKey(0)
    key, kx, keps = jax.random.split(key, 3)
    x = jax.random.normal(kx, (batch, num_var, 28, 28), jnp.float32)
    eps = jax.random.uniform(keps, (batch, num_latent), jnp.float32)  # torch.rand_like

    params = init_params(key, num_var, num_latent, num_neurons, maxpool_indices)

    z, mu, log_sigma = categorical_encoder_forward(x, params, eps)
    jax.block_until_ready((z, mu, log_sigma))

    assert z.shape == (batch, num_latent)
    assert mu.shape == (batch, num_latent)
    assert log_sigma.shape == (batch, num_latent)
    assert bool(jnp.all(log_sigma >= 0.0))  # softplus output is non-negative
    print("KERNEL_OK")
</pallas_src>

<mosaic_0001>
module attributes {stable_mosaic.version = 11 : i64} {
  func.func @kernel(%arg0: i32, %arg1: memref<1x30x112xbf16, #tpu.memory_space<vmem>>, %arg2: memref<3x112x224xbf16, #tpu.memory_space<vmem>>, %arg3: memref<1x224xf32, #tpu.memory_space<vmem>>, %arg4: memref<1x224xf32, #tpu.memory_space<vmem>>, %arg5: memref<1x224xf32, #tpu.memory_space<vmem>>, %arg6: memref<1x16x224xbf16, #tpu.memory_space<vmem>>) attributes {dimension_semantics = [#tpu.dimension_semantics<parallel>], iteration_bounds = array<i64: 2>, scalar_prefetch = 0 : i64, scratch_operands = 0 : i64, tpu.core_type = #tpu.core_type<tc>, window_params = [{transform_indices = @transform_0, window_bounds = array<i64: 1, 30, 112>}, {pipeline_mode = #tpu.pipeline_mode<synchronous>, transform_indices = @transform_1, window_bounds = array<i64: 3, 112, 224>}, {pipeline_mode = #tpu.pipeline_mode<synchronous>, transform_indices = @transform_2, window_bounds = array<i64: 1, 224>}, {pipeline_mode = #tpu.pipeline_mode<synchronous>, transform_indices = @transform_3, window_bounds = array<i64: 1, 224>}, {pipeline_mode = #tpu.pipeline_mode<synchronous>, transform_indices = @transform_4, window_bounds = array<i64: 1, 224>}, {transform_indices = @transform_5, window_bounds = array<i64: 1, 16, 224>}]} {
    %c0 = arith.constant 0 : index
    %c0_0 = arith.constant 0 : index
    %c0_1 = arith.constant 0 : index
    %0 = vector.load %arg1[%c0, %c0_0, %c0_1] : memref<1x30x112xbf16, #tpu.memory_space<vmem>>, vector<1x30x112xbf16>
    %1 = vector.shape_cast %0 : vector<1x30x112xbf16> to vector<30x112xbf16>
    %2 = arith.extf %1 : vector<30x112xbf16> to vector<30x112xf32>
    %3 = vector.extract_strided_slice %2 {offsets = [0, 0], sizes = [28, 112], strides = [1, 1]} : vector<30x112xf32> to vector<28x112xf32>
    %c0_2 = arith.constant 0 : index
    %c0_3 = arith.constant 0 : index
    %c0_4 = arith.constant 0 : index
    %4 = vector.load %arg2[%c0_2, %c0_3, %c0_4] : memref<3x112x224xbf16, #tpu.memory_space<vmem>>, vector<1x112x224xbf16>
    %5 = vector.shape_cast %4 : vector<1x112x224xbf16> to vector<112x224xbf16>
    %6 = arith.extf %5 : vector<112x224xbf16> to vector<112x224xf32>
    %cst = arith.constant dense<0.000000e+00> : vector<28x224xf32>
    %7 = tpu.matmul %3, %6, %cst {dimension_numbers = #tpu.dot_dimension_numbers<[1], [0], [0], [1], [0, 0, 1, 1], [], []>} : vector<28x112xf32>, vector<112x224xf32>, vector<28x224xf32> -> vector<28x224xf32>
    %8 = vector.extract_strided_slice %2 {offsets = [1, 0], sizes = [28, 112], strides = [1, 1]} : vector<30x112xf32> to vector<28x112xf32>
    %c1 = arith.constant 1 : index
    %c0_5 = arith.constant 0 : index
    %c0_6 = arith.constant 0 : index
    %9 = vector.load %arg2[%c1, %c0_5, %c0_6] : memref<3x112x224xbf16, #tpu.memory_space<vmem>>, vector<1x112x224xbf16>
    %10 = vector.shape_cast %9 : vector<1x112x224xbf16> to vector<112x224xbf16>
    %11 = arith.extf %10 : vector<112x224xbf16> to vector<112x224xf32>
    %cst_7 = arith.constant dense<0.000000e+00> : vector<28x224xf32>
    %12 = tpu.matmul %8, %11, %cst_7 {dimension_numbers = #tpu.dot_dimension_numbers<[1], [0], [0], [1], [0, 0, 1, 1], [], []>} : vector<28x112xf32>, vector<112x224xf32>, vector<28x224xf32> -> vector<28x224xf32>
    %13 = arith.addf %7, %12 : vector<28x224xf32>
    %14 = vector.extract_strided_slice %2 {offsets = [2, 0], sizes = [28, 112], strides = [1, 1]} : vector<30x112xf32> to vector<28x112xf32>
    %c2 = arith.constant 2 : index
    %c0_8 = arith.constant 0 : index
    %c0_9 = arith.constant 0 : index
    %15 = vector.load %arg2[%c2, %c0_8, %c0_9] : memref<3x112x224xbf16, #tpu.memory_space<vmem>>, vector<1x112x224xbf16>
    %16 = vector.shape_cast %15 : vector<1x112x224xbf16> to vector<112x224xbf16>
    %17 = arith.extf %16 : vector<112x224xbf16> to vector<112x224xf32>
    %cst_10 = arith.constant dense<0.000000e+00> : vector<28x224xf32>
    %18 = tpu.matmul %14, %17, %cst_10 {dimension_numbers = #tpu.dot_dimension_numbers<[1], [0], [0], [1], [0, 0, 1, 1], [], []>} : vector<28x112xf32>, vector<112x224xf32>, vector<28x224xf32> -> vector<28x224xf32>
    %19 = arith.addf %13, %18 : vector<28x224xf32>
    %c0_11 = arith.constant 0 : index
    %c0_12 = arith.constant 0 : index
    %20 = vector.load %arg3[%c0_11, %c0_12] : memref<1x224xf32, #tpu.memory_space<vmem>>, vector<1x224xf32>
    %21 = vector.broadcast %20 : vector<1x224xf32> to vector<28x224xf32>
    %22 = arith.addf %19, %21 : vector<28x224xf32>
    %23 = vector.extract_strided_slice %22 {offsets = [0, 0], sizes = [1, 224], strides = [1, 1]} : vector<28x224xf32> to vector<1x224xf32>
    %24 = vector.extract_strided_slice %22 {offsets = [1, 0], sizes = [1, 224], strides = [1, 1]} : vector<28x224xf32> to vector<1x224xf32>
    %25 = arith.maximumf %23, %24 : vector<1x224xf32>
    %26 = vector.extract_strided_slice %22 {offsets = [2, 0], sizes = [1, 224], strides = [1, 1]} : vector<28x224xf32> to vector<1x224xf32>
    %27 = vector.extract_strided_slice %22 {offsets = [3, 0], sizes = [1, 224], strides = [1, 1]} : vector<28x224xf32> to vector<1x224xf32>
    %28 = arith.maximumf %26, %27 : vector<1x224xf32>
    %29 = vector.extract_strided_slice %22 {offsets = [4, 0], sizes = [1, 224], strides = [1, 1]} : vector<28x224xf32> to vector<1x224xf32>
    %30 = vector.extract_strided_slice %22 {offsets = [5, 0], sizes = [1, 224], strides = [1, 1]} : vector<28x224xf32> to vector<1x224xf32>
    %31 = arith.maximumf %29, %30 : vector<1x224xf32>
    %32 = vector.extract_strided_slice %22 {offsets = [6, 0], sizes = [1, 224], strides = [1, 1]} : vector<28x224xf32> to vector<1x224xf32>
    %33 = vector.extract_strided_slice %22 {offsets = [7, 0], sizes = [1, 224], strides = [1, 1]} : vector<28x224xf32> to vector<1x224xf32>
    %34 = arith.maximumf %32, %33 : vector<1x224xf32>
    %35 = vector.extract_strided_slice %22 {offsets = [8, 0], sizes = [1, 224], strides = [1, 1]} : vector<28x224xf32> to vector<1x224xf32>
    %36 = vector.extract_strided_slice %22 {offsets = [9, 0], sizes = [1, 224], strides = [1, 1]} : vector<28x224xf32> to vector<1x224xf32>
    %37 = arith.maximumf %35, %36 : vector<1x224xf32>
    %38 = vector.extract_strided_slice %22 {offsets = [10, 0], sizes = [1, 224], strides = [1, 1]} : vector<28x224xf32> to vector<1x224xf32>
    %39 = vector.extract_strided_slice %22 {offsets = [11, 0], sizes = [1, 224], strides = [1, 1]} : vector<28x224xf32> to vector<1x224xf32>
    %40 = arith.maximumf %38, %39 : vector<1x224xf32>
    %41 = vector.extract_strided_slice %22 {offsets = [12, 0], sizes = [1, 224], strides = [1, 1]} : vector<28x224xf32> to vector<1x224xf32>
    %42 = vector.extract_strided_slice %22 {offsets = [13, 0], sizes = [1, 224], strides = [1, 1]} : vector<28x224xf32> to vector<1x224xf32>
    %43 = arith.maximumf %41, %42 : vector<1x224xf32>
    %44 = vector.extract_strided_slice %22 {offsets = [14, 0], sizes = [1, 224], strides = [1, 1]} : vector<28x224xf32> to vector<1x224xf32>
    %45 = vector.extract_strided_slice %22 {offsets = [15, 0], sizes = [1, 224], strides = [1, 1]} : vector<28x224xf32> to vector<1x224xf32>
    %46 = arith.maximumf %44, %45 : vector<1x224xf32>
    %47 = vector.extract_strided_slice %22 {offsets = [16, 0], sizes = [1, 224], strides = [1, 1]} : vector<28x224xf32> to vector<1x224xf32>
    %48 = vector.extract_strided_slice %22 {offsets = [17, 0], sizes = [1, 224], strides = [1, 1]} : vector<28x224xf32> to vector<1x224xf32>
    %49 = arith.maximumf %47, %48 : vector<1x224xf32>
    %50 = vector.extract_strided_slice %22 {offsets = [18, 0], sizes = [1, 224], strides = [1, 1]} : vector<28x224xf32> to vector<1x224xf32>
    %51 = vector.extract_strided_slice %22 {offsets = [19, 0], sizes = [1, 224], strides = [1, 1]} : vector<28x224xf32> to vector<1x224xf32>
    %52 = arith.maximumf %50, %51 : vector<1x224xf32>
    %53 = vector.extract_strided_slice %22 {offsets = [20, 0], sizes = [1, 224], strides = [1, 1]} : vector<28x224xf32> to vector<1x224xf32>
    %54 = vector.extract_strided_slice %22 {offsets = [21, 0], sizes = [1, 224], strides = [1, 1]} : vector<28x224xf32> to vector<1x224xf32>
    %55 = arith.maximumf %53, %54 : vector<1x224xf32>
    %56 = vector.extract_strided_slice %22 {offsets = [22, 0], sizes = [1, 224], strides = [1, 1]} : vector<28x224xf32> to vector<1x224xf32>
    %57 = vector.extract_strided_slice %22 {offsets = [23, 0], sizes = [1, 224], strides = [1, 1]} : vector<28x224xf32> to vector<1x224xf32>
    %58 = arith.maximumf %56, %57 : vector<1x224xf32>
    %59 = vector.extract_strided_slice %22 {offsets = [24, 0], sizes = [1, 224], strides = [1, 1]} : vector<28x224xf32> to vector<1x224xf32>
    %60 = vector.extract_strided_slice %22 {offsets = [25, 0], sizes = [1, 224], strides = [1, 1]} : vector<28x224xf32> to vector<1x224xf32>
    %61 = arith.maximumf %59, %60 : vector<1x224xf32>
    %62 = vector.extract_strided_slice %22 {offsets = [26, 0], sizes = [1, 224], strides = [1, 1]} : vector<28x224xf32> to vector<1x224xf32>
    %63 = vector.extract_strided_slice %22 {offsets = [27, 0], sizes = [1, 224], strides = [1, 1]} : vector<28x224xf32> to vector<1x224xf32>
    %64 = arith.maximumf %62, %63 : vector<1x224xf32>
    %65 = tpu.concatenate %25, %28, %31, %34, %37, %40, %43, %46, %49, %52, %55, %58, %61, %64 in 0 : vector<1x224xf32>, vector<1x224xf32>, vector<1x224xf32>, vector<1x224xf32>, vector<1x224xf32>, vector<1x224xf32>, vector<1x224xf32>, vector<1x224xf32>, vector<1x224xf32>, vector<1x224xf32>, vector<1x224xf32>, vector<1x224xf32>, vector<1x224xf32>, vector<1x224xf32> -> vector<14x224xf32>
    %66 = vector.extract_strided_slice %65 {offsets = [0, 8], sizes = [14, 216], strides = [1, 1]} : vector<14x224xf32> to vector<14x216xf32>
    %67 = vector.extract_strided_slice %65 {offsets = [0, 0], sizes = [14, 8], strides = [1, 1]} : vector<14x224xf32> to vector<14x8xf32>
    %68 = tpu.concatenate %66, %67 in 1 : vector<14x216xf32>, vector<14x8xf32> -> vector<14x224xf32>
    %69 = arith.maximumf %65, %68 : vector<14x224xf32>
    %cst_13 = arith.constant 0.000000e+00 : f32
    %70 = vector.broadcast %cst_13 : f32 to vector<14x224xf32>
    %71 = arith.maximumf %69, %70 : vector<14x224xf32>
    %c0_14 = arith.constant 0 : index
    %c0_15 = arith.constant 0 : index
    %72 = vector.load %arg4[%c0_14, %c0_15] : memref<1x224xf32, #tpu.memory_space<vmem>>, vector<1x224xf32>
    %73 = vector.broadcast %72 : vector<1x224xf32> to vector<14x224xf32>
    %74 = arith.mulf %71, %73 : vector<14x224xf32>
    %c0_16 = arith.constant 0 : index
    %c0_17 = arith.constant 0 : index
    %75 = vector.load %arg5[%c0_16, %c0_17] : memref<1x224xf32, #tpu.memory_space<vmem>>, vector<1x224xf32>
    %76 = vector.broadcast %75 : vector<1x224xf32> to vector<14x224xf32>
    %77 = arith.addf %74, %76 : vector<14x224xf32>
    %cst_18 = arith.constant 0.000000e+00 : bf16
    %78 = vector.broadcast %cst_18 : bf16 to vector<1x16x224xbf16>
    %c0_19 = arith.constant 0 : index
    %c0_20 = arith.constant 0 : index
    %c0_21 = arith.constant 0 : index
    %79 = vector.load %arg6[%c0_19, %c0_20, %c0_21] : memref<1x16x224xbf16, #tpu.memory_space<vmem>>, vector<1x16x224xbf16>
    tpu.vector_store %arg6[%c0_19, %c0_20, %c0_21], %78 {strides = array<i32>} : memref<1x16x224xbf16, #tpu.memory_space<vmem>>, vector<1x16x224xbf16>,
    %80 = arith.truncf %77 : vector<14x224xf32> to vector<14x224xbf16>
    %c0_22 = arith.constant 0 : index
    %c1_23 = arith.constant 1 : index
    %c0_24 = arith.constant 0 : index
    %81 = vector.load %arg6[%c0_22, %c1_23, %c0_24] : memref<1x16x224xbf16, #tpu.memory_space<vmem>>, vector<1x14x224xbf16>
    %82 = vector.shape_cast %81 : vector<1x14x224xbf16> to vector<14x224xbf16>
    %83 = vector.shape_cast %80 : vector<14x224xbf16> to vector<1x14x224xbf16>
    tpu.vector_store %arg6[%c0_22, %c1_23, %c0_24], %83 {strides = array<i32>} : memref<1x16x224xbf16, #tpu.memory_space<vmem>>, vector<1x14x224xbf16>,
    return
  }
  func.func @transform_0(%arg0: i32) -> (i32, i32, i32) {
    %c0_i32 = arith.constant 0 : i32
    %c0_i32_0 = arith.constant 0 : i32
    %c0_i32_1 = arith.constant 0 : i32
    return %arg0, %c0_i32, %c0_i32_0 : i32, i32, i32
  }
  func.func @transform_1(%arg0: i32) -> (i32, i32, i32) {
    %c0_i32 = arith.constant 0 : i32
    %c0_i32_0 = arith.constant 0 : i32
    %c0_i32_1 = arith.constant 0 : i32
    %c0_i32_2 = arith.constant 0 : i32
    return %c0_i32, %c0_i32_0, %c0_i32_1 : i32, i32, i32
  }
  func.func @transform_2(%arg0: i32) -> (i32, i32) {
    %c0_i32 = arith.constant 0 : i32
    %c0_i32_0 = arith.constant 0 : i32
    %c0_i32_1 = arith.constant 0 : i32
    return %c0_i32, %c0_i32_0 : i32, i32
  }
  func.func @transform_3(%arg0: i32) -> (i32, i32) {
    %c0_i32 = arith.constant 0 : i32
    %c0_i32_0 = arith.constant 0 : i32
    %c0_i32_1 = arith.constant 0 : i32
    return %c0_i32, %c0_i32_0 : i32, i32
  }
  func.func @transform_4(%arg0: i32) -> (i32, i32) {
    %c0_i32 = arith.constant 0 : i32
    %c0_i32_0 = arith.constant 0 : i32
    %c0_i32_1 = arith.constant 0 : i32
    return %c0_i32, %c0_i32_0 : i32, i32
  }
  func.func @transform_5(%arg0: i32) -> (i32, i32, i32) {
    %c0_i32 = arith.constant 0 : i32
    %c0_i32_0 = arith.constant 0 : i32
    %c0_i32_1 = arith.constant 0 : i32
    return %arg0, %c0_i32, %c0_i32_0 : i32, i32, i32
  }
}

</mosaic_0001>

<llo_original>
// kernel: tpu_custom_call.1
$region0: #{tpu_custom_call.1}
  #allocation0 [shape = 'u32[]', space=smem, size = 0x4, offset = 0x4, fixed_abs, tag = 'smem constant byte address 0x4 - core index']
  #allocation1 [shape = 'u32[144,128]{1,0:T(1,128)}', space=vmem, size = 0x12000, scoped, tag = 'internal scratch']
  %s0 = inlined_call_operand.vmem [shape: bf16[2,30,112], index: 0, kind: input, shape index: {}]
  %s1 = inlined_call_operand.hbm [shape: bf16[3,112,224], index: 1, kind: input, shape index: {}]
  %s2 = inlined_call_operand.vmem [shape: f32[1,224], index: 2, kind: input, shape index: {}]
  %s3 = inlined_call_operand.vmem [shape: f32[1,224], index: 3, kind: input, shape index: {}]
  %s4 = inlined_call_operand.vmem [shape: f32[1,224], index: 4, kind: input, shape index: {}]
  %s5 = inlined_call_operand.hbm [shape: bf16[2,16,224], index: 5, kind: output, shape index: {}]
  %s6 = sld [smem:[#allocation0]]
  $region57: #{tpu_custom_call.1} parent=0
    _
  %s8 = ssub.s32 1, %s6
  %s9 = scalar_select 0, %s8, %s6
  $region1: #{tpu_custom_call.1} parent=0
    #allocation2 [shape = 'u8[172032]{0}', space=vmem, size = 0x2a000, scoped, tag = 'input window, operand 1, single buffered']
    #allocation3 [shape = 's32[2]{0}', space=sflag, size = 0x8, scoped, tag = 'scoped memory for tpu_custom_call.1']
    #allocation4 [shape = 's32[2]{0}', space=sflag, size = 0x8, scoped, tag = 'scoped memory for tpu_custom_call.1']
    #allocation5 [shape = 'u8[16384]{0}', space=vmem, size = 0x4000, scoped, tag = 'output window, operand 0']
    %10 = vsyncpa [#allocation3], 0
    %11 = vsyncpa [#allocation4], 0
    %s12 = scalar_lea.sflag [#allocation4], 1
    %13 = vsyncpa %s12, 0
    loop: start=0, step=1, limit=4
    $region2: #{tpu_custom_call.1} parent=1 // loop_pre_header
      _
    $region3: #{tpu_custom_call.1} parent=1 // loop_header
      %s15 = sphi 0, %s19
      %p16 = scmp.ge.s32.totalorder %s15, 4
      %s25 = sphi 0, %s27
      %s28 = sphi 0, %s25
      %s29 = sphi 0, %s28
      %s45 = sphi 0, %s29
      %s49 = sphi 0, %s49
      %s51 = sphi 0, %s49
      %s52 = sphi 0, %s51
      %s66 = sphi 0, %s52
      %s70 = sphi 0, %s70
      %s72 = sphi 0, %s70
      %s73 = sphi 0, %s72
      %s87 = sphi 0, %s73
      %s91 = sphi 0, %s91
      %s93 = sphi 0, %s91
      %s94 = sphi 0, %s93
      %s108 = sphi 0, %s94
      %s112 = sphi 0, %s112
      %s114 = sphi 0, %s112
      %s115 = sphi 0, %s114
      %s129 = sphi 0, %s115
      %s135 = sphi 0, %s137
      %s138 = sphi 0, %s135
      %s139 = sphi 0, %s138
      %s155 = sphi 0, %s139
    $region4: #{tpu_custom_call.1} parent=1 // loop_header_branch
      %18 = sbr.rel (%p16) target = $region8
    $region5: #{tpu_custom_call.1} parent=1 // loop_body
      %s20 = ssub.s32 %s15, 1
      %s21 = ssub.s32 %s15, 2
      %s22 = sadd.s32 %s15, 1
      %s23 = ssub.s32 %s15, %s22
      %p24 = scmp.eq.s32.totalorder %s23, 0
      %s26 = sadd.s32 %s25, 1
      %s27 = scalar_select %p24, %s25, %s26
      %p30 = pneg %p24
      %p31 = scmp.eq.s32.totalorder %s15, 1
      %p32 = por %p30, %p31
      %p33 = scmp.ne.s32.totalorder %s25, %s28
      %p34 = scmp.eq.s32.totalorder %s15, 0
      %p35 = por %p33, %p34
      %p36 = scmp.ne.s32.totalorder %s25, %s28
      %p37 = scmp.eq.s32.totalorder %s20, 1
      %p38 = por %p36, %p37
      %p39 = scmp.ne.s32.totalorder %s28, %s29
      %p40 = scmp.eq.s32.totalorder %s20, 0
      %p41 = por %p39, %p40
      %p42 = scmp.ne.s32.totalorder %s28, %s29
      %p43 = scmp.eq.s32.totalorder %s21, 1
      %p44 = por %p42, %p43
      %p46 = scmp.ne.s32.totalorder %s29, %s45
      %p47 = scmp.eq.s32.totalorder %s21, 0
      %p48 = por %p46, %p47
      %s50 = sadd.s32 %s49, 1
      %p53 = scmp.eq.s32.totalorder %s15, 1
      %p54 = scmp.ne.s32.totalorder %s49, %s51
      %p55 = scmp.eq.s32.totalorder %s15, 0
      %p56 = por %p54, %p55
      %p57 = scmp.ne.s32.totalorder %s49, %s51
      %p58 = scmp.eq.s32.totalorder %s20, 1
      %p59 = por %p57, %p58
      %p60 = scmp.ne.s32.totalorder %s51, %s52
      %p61 = scmp.eq.s32.totalorder %s20, 0
      %p62 = por %p60, %p61
      %p63 = scmp.ne.s32.totalorder %s51, %s52
      %p64 = scmp.eq.s32.totalorder %s21, 1
      %p65 = por %p63, %p64
      %p67 = scmp.ne.s32.totalorder %s52, %s66
      %p68 = scmp.eq.s32.totalorder %s21, 0
      %p69 = por %p67, %p68
      %s71 = sadd.s32 %s70, 1
      %p74 = scmp.eq.s32.totalorder %s15, 1
      %p75 = scmp.ne.s32.totalorder %s70, %s72
      %p76 = scmp.eq.s32.totalorder %s15, 0
      %p77 = por %p75, %p76
      %p78 = scmp.ne.s32.totalorder %s70, %s72
      %p79 = scmp.eq.s32.totalorder %s20, 1
      %p80 = por %p78, %p79
      %p81 = scmp.ne.s32.totalorder %s72, %s73
      %p82 = scmp.eq.s32.totalorder %s20, 0
      %p83 = por %p81, %p82
      %p84 = scmp.ne.s32.totalorder %s72, %s73
      %p85 = scmp.eq.s32.totalorder %s21, 1
      %p86 = por %p84, %p85
      %p88 = scmp.ne.s32.totalorder %s73, %s87
      %p89 = scmp.eq.s32.totalorder %s21, 0
      %p90 = por %p88, %p89
      %s92 = sadd.s32 %s91, 1
      %p95 = scmp.eq.s32.totalorder %s15, 1
      %p96 = scmp.ne.s32.totalorder %s91, %s93
      %p97 = scmp.eq.s32.totalorder %s15, 0
      %p98 = por %p96, %p97
      %p99 = scmp.ne.s32.totalorder %s91, %s93
      %p100 = scmp.eq.s32.totalorder %s20, 1
      %p101 = por %p99, %p100
      %p102 = scmp.ne.s32.totalorder %s93, %s94
      %p103 = scmp.eq.s32.totalorder %s20, 0
      %p104 = por %p102, %p103
      %p105 = scmp.ne.s32.totalorder %s93, %s94
      %p106 = scmp.eq.s32.totalorder %s21, 1
      %p107 = por %p105, %p106
      %p109 = scmp.ne.s32.totalorder %s94, %s108
      %p110 = scmp.eq.s32.totalorder %s21, 0
      %p111 = por %p109, %p110
      %s113 = sadd.s32 %s112, 1
      %p116 = scmp.eq.s32.totalorder %s15, 1
      %p117 = scmp.ne.s32.totalorder %s112, %s114
      %p118 = scmp.eq.s32.totalorder %s15, 0
      %p119 = por %p117, %p118
      %p120 = scmp.ne.s32.totalorder %s112, %s114
      %p121 = scmp.eq.s32.totalorder %s20, 1
      %p122 = por %p120, %p121
      %p123 = scmp.ne.s32.totalorder %s114, %s115
      %p124 = scmp.eq.s32.totalorder %s20, 0
      %p125 = por %p123, %p124
      %p126 = scmp.ne.s32.totalorder %s114, %s115
      %p127 = scmp.eq.s32.totalorder %s21, 1
      %p128 = por %p126, %p127
      %p130 = scmp.ne.s32.totalorder %s115, %s129
      %p131 = scmp.eq.s32.totalorder %s21, 0
      %p132 = por %p130, %p131
      %s133 = ssub.s32 %s15, %s22
      %p134 = scmp.eq.s32.totalorder %s133, 0
      %s136 = sadd.s32 %s135, 1
      %s137 = scalar_select %p134, %s135, %s136
      %p140 = pneg %p134
      %p141 = scmp.eq.s32.totalorder %s15, 1
      %p142 = por %p140, %p141
      %p143 = scmp.ne.s32.totalorder %s135, %s138
      %p144 = scmp.eq.s32.totalorder %s15, 0
      %p145 = por %p143, %p144
      %p146 = scmp.ne.s32.totalorder %s135, %s138
      %p147 = scmp.eq.s32.totalorder %s20, 1
      %p148 = por %p146, %p147
      %p149 = scmp.ne.s32.totalorder %s138, %s139
      %p150 = scmp.eq.s32.totalorder %s20, 0
      %p151 = por %p149, %p150
      %p152 = scmp.ne.s32.totalorder %s138, %s139
      %p153 = scmp.eq.s32.totalorder %s21, 1
      %p154 = por %p152, %p153
      %p156 = scmp.ne.s32.totalorder %s139, %s155
      %p157 = scmp.eq.s32.totalorder %s21, 0
      %p158 = por %p156, %p157
      %p159 = scmp.le.s32.totalorder 1, %s15
      %p160 = scmp.lt.s32.totalorder %s15, 3
      %p161 = pnand %p159, %p160
      %p162 = pneg %p161
      // Predicated region
      $region9: #{tpu_custom_call.1} parent=5 // pred_check
        _
      $region10: #{tpu_custom_call.1} parent=5 // pred_check_branch
        %164 = sbr.rel (%p161) target = $region12
      $region11: #{tpu_custom_call.1} parent=5 // pred_region
        %s165 = ssub.s32 %s15, 1
        // Predicated region
        $region13: #{tpu_custom_call.1} parent=11 // pred_check
          %p166 = pneg %p62
        $region14: #{tpu_custom_call.1} parent=11 // pred_check_branch
          %168 = sbr.rel (%p166) target = $region16
        $region15: #{tpu_custom_call.1} parent=11 // pred_region
          %s170 = ssub.s32 5376, 5376
          %171 = vsyncadd [#allocation3], %s170
          %s172 = sshll.u32 [#allocation2], 4
          %s173 = int_to_ptr.vmem [resolvable:$true] %s172
          %178 = dma.hbm_to_vmem [thread:$0]  %s1, 5376, %s173, [#allocation3], 128, 128, 8
        $region16: #{tpu_custom_call.1} parent=11 // pred_fallthru
          _
        // Predicated region
        $region17: #{tpu_custom_call.1} parent=11 // pred_check
          %p179 = pneg %p83
        $region18: #{tpu_custom_call.1} parent=11 // pred_check_branch
          %181 = sbr.rel (%p179) target = $region20
        $region19: #{tpu_custom_call.1} parent=11 // pred_region
          _
        $region20: #{tpu_custom_call.1} parent=11 // pred_fallthru
          _
        // Predicated region
        $region21: #{tpu_custom_call.1} parent=11 // pred_check
          %p182 = pneg %p104
        $region22: #{tpu_custom_call.1} parent=11 // pred_check_branch
          %184 = sbr.rel (%p182) target = $region24
        $region23: #{tpu_custom_call.1} parent=11 // pred_region
          _
        $region24: #{tpu_custom_call.1} parent=11 // pred_fallthru
          _
        // Predicated region
        $region25: #{tpu_custom_call.1} parent=11 // pred_check
          %p185 = pneg %p125
        $region26: #{tpu_custom_call.1} parent=11 // pred_check_branch
          %187 = sbr.rel (%p185) target = $region28
        $region27: #{tpu_custom_call.1} parent=11 // pred_region
          _
        $region28: #{tpu_custom_call.1} parent=11 // pred_fallthru
          _
      $region12: #{tpu_custom_call.1} parent=5 // pred_fallthru
        _
      %p188 = scmp.lt.s32.totalorder %s15, 2
      // Predicated region
      $region29: #{tpu_custom_call.1} parent=5 // pred_check
        %p189 = pneg %p188
      $region30: #{tpu_custom_call.1} parent=5 // pred_check_branch
        %191 = sbr.rel (%p189) target = $region32
      $region31: #{tpu_custom_call.1} parent=5 // pred_region
        // Predicated region
        $region33: #{tpu_custom_call.1} parent=31 // pred_check
          %p192 = pneg %p35
        $region34: #{tpu_custom_call.1} parent=31 // pred_check_branch
          %194 = sbr.rel (%p192) target = $region36
        $region35: #{tpu_custom_call.1} parent=31 // pred_region
          %p195 = scmp.lt.s32.totalorder %s15, 1
          %s196 = scalar_select %p195, %s15, 1
          %s197 = smul.addr %s196, 4
          %s198 = smul.addr %s197, 4
          %s199 = scalar_lea.vmem %s0, %s198
        $region36: #{tpu_custom_call.1} parent=31 // pred_fallthru
          _
      $region32: #{tpu_custom_call.1} parent=5 // pred_fallthru
        _
      %p200 = scmp.le.s32.totalorder 1, %s15
      %p201 = scmp.lt.s32.totalorder %s15, 3
      %p202 = pnand %p200, %p201
      %p203 = pneg %p202
      // Predicated region
      $region37: #{tpu_custom_call.1} parent=5 // pred_check
        _
      $region38: #{tpu_custom_call.1} parent=5 // pred_check_branch
        %205 = sbr.rel (%p202) target = $region40
      $region39: #{tpu_custom_call.1} parent=5 // pred_region
        %s206 = ssub.s32 %s15, 1
        // Predicated region
        $region41: #{tpu_custom_call.1} parent=39 // pred_check
          %p207 = pneg %p62
        $region42: #{tpu_custom_call.1} parent=39 // pred_check_branch
          %209 = sbr.rel (%p207) target = $region44
        $region43: #{tpu_custom_call.1} parent=39 // pred_region
          %210 = dma.done [#allocation3], 5376
        $region44: #{tpu_custom_call.1} parent=39 // pred_fallthru
          _
        %p211 = scmp.lt.s32.totalorder %s20, 1
        %s212 = scalar_select %p211, %s20, 1
        %s213 = smul.addr %s212, 4
        %s214 = smul.addr %s213, 4
        %s215 = scalar_lea.vmem %s0, %s214
        %p216 = pneg %p41
        %p217 = pneg %p38
        %p218 = pneg %p62
        %p219 = pneg %p59
        %p220 = pneg %p83
        %p221 = pneg %p80
        %p222 = pneg %p104
        %p223 = pneg %p101
        %p224 = pneg %p125
        %p225 = pneg %p122
        %p226 = pneg %p151
        %p227 = pneg %p148
        %s228 = sand.u32 %s138, 1
        %s229 = scalar_lea.sflag [#allocation4], %s228
        %s230 = sand.u32 %s138, 1
        %s231 = smul.addr %s230, 16
        %s232 = scalar_lea.vmem [#allocation5], %s231
        %p233 = scmp.lt.s32.totalorder %s20, 1
        %s234 = scalar_select %p233, %s20, 1
        %s235 = smul.addr %s234, 4
        %s236 = smul.addr %s235, 4
        %s237 = scalar_lea.vmem %s0, %s236
        %v239 = vld [vmem:[%s237] sm:$0xf]
        %v240 = vld [vmem:[%s237 + $0x4] sm:$0xf]
        %v241 = vld [vmem:[%s237 + $0x8] sm:$0xf]
        %v242 = vld [vmem:[%s237 + $0xc] sm:$0x7]
        %v243 = vunpack.c.l.bf16 %v239
        %v244 = vunpack.c.l.bf16 %v240
        %v245 = vunpack.c.l.bf16 %v241
        %v246 = vunpack.c.l.bf16 %v242
        %v247 = vld [vmem:[#allocation2] sm:$0xff]
        %v248 = vld [vmem:[#allocation2 + $0x8] sm:$0xff]
        %v249 = vld [vmem:[#allocation2 + $0x10] sm:$0xff]
        %v250 = vld [vmem:[#allocation2 + $0x18] sm:$0xff]
        %v251 = vld [vmem:[#allocation2 + $0x20] sm:$0xff]
        %v252 = vld [vmem:[#allocation2 + $0x28] sm:$0xff]
        %v253 = vld [vmem:[#allocation2 + $0x30] sm:$0xff]
        %v254 = vld [vmem:[#allocation2 + $0x38] sm:$0xff]
        %v255 = vld [vmem:[#allocation2 + $0x40] sm:$0xff]
        %v256 = vld [vmem:[#allocation2 + $0x48] sm:$0xff]
        %v257 = vld [vmem:[#allocation2 + $0x50] sm:$0xff]
        %v258 = vld [vmem:[#allocation2 + $0x58] sm:$0xff]
        %v259 = vld [vmem:[#allocation2 + $0x60] sm:$0xff]
        %v260 = vld [vmem:[#allocation2 + $0x68] sm:$0xff]
        %v261 = vunpack.c.l.bf16 %v247
        %v262 = vunpack.c.h.bf16 %v247
        %v263 = vunpack.c.l.bf16 %v248
        %v264 = vunpack.c.h.bf16 %v248
        %v265 = vunpack.c.l.bf16 %v249
        %v266 = vunpack.c.h.bf16 %v249
        %v267 = vunpack.c.l.bf16 %v250
        %v268 = vunpack.c.h.bf16 %v250
        %v269 = vunpack.c.l.bf16 %v251
        %v270 = vunpack.c.h.bf16 %v251
        %v271 = vunpack.c.l.bf16 %v252
        %v272 = vunpack.c.h.bf16 %v252
        %v273 = vunpack.c.l.bf16 %v253
        %v274 = vunpack.c.h.bf16 %v253
        %v275 = vunpack.c.l.bf16 %v254
        %v276 = vunpack.c.h.bf16 %v254
        %v277 = vunpack.c.l.bf16 %v255
        %v278 = vunpack.c.h.bf16 %v255
        %v279 = vunpack.c.l.bf16 %v256
        %v280 = vunpack.c.h.bf16 %v256
        %v281 = vunpack.c.l.bf16 %v257
        %v282 = vunpack.c.h.bf16 %v257
        %v283 = vunpack.c.l.bf16 %v258
        %v284 = vunpack.c.h.bf16 %v258
        %v285 = vunpack.c.l.bf16 %v259
        %v286 = vunpack.c.h.bf16 %v259
        %v287 = vunpack.c.l.bf16 %v260
        %v288 = vunpack.c.h.bf16 %v260
        %s289 = scalar_lea.vmem [#allocation2], 112
        %v290 = vld [vmem:[%s289] sm:$0xff]
        %v291 = vld [vmem:[%s289 + $0x8] sm:$0xff]
        %v292 = vld [vmem:[%s289 + $0x10] sm:$0xff]
        %v293 = vld [vmem:[%s289 + $0x18] sm:$0xff]
        %v294 = vld [vmem:[%s289 + $0x20] sm:$0xff]
        %v295 = vld [vmem:[%s289 + $0x28] sm:$0xff]
        %v296 = vld [vmem:[%s289 + $0x30] sm:$0xff]
        %v297 = vld [vmem:[%s289 + $0x38] sm:$0xff]
        %v298 = vld [vmem:[%s289 + $0x40] sm:$0xff]
        %v299 = vld [vmem:[%s289 + $0x48] sm:$0xff]
        %v300 = vld [vmem:[%s289 + $0x50] sm:$0xff]
        %v301 = vld [vmem:[%s289 + $0x58] sm:$0xff]
        %v302 = vld [vmem:[%s289 + $0x60] sm:$0xff]
        %v303 = vld [vmem:[%s289 + $0x68] sm:$0xff]
        %v304 = vunpack.c.l.bf16 %v290
        %v305 = vunpack.c.h.bf16 %v290
        %v306 = vunpack.c.l.bf16 %v291
        %v307 = vunpack.c.h.bf16 %v291
        %v308 = vunpack.c.l.bf16 %v292
        %v309 = vunpack.c.h.bf16 %v292
        %v310 = vunpack.c.l.bf16 %v293
        %v311 = vunpack.c.h.bf16 %v293
        %v312 = vunpack.c.l.bf16 %v294
        %v313 = vunpack.c.h.bf16 %v294
        %v314 = vunpack.c.l.bf16 %v295
        %v315 = vunpack.c.h.bf16 %v295
        %v316 = vunpack.c.l.bf16 %v296
        %v317 = vunpack.c.h.bf16 %v296
        %v318 = vunpack.c.l.bf16 %v297
        %v319 = vunpack.c.h.bf16 %v297
        %v320 = vunpack.c.l.bf16 %v298
        %v321 = vunpack.c.h.bf16 %v298
        %v322 = vunpack.c.l.bf16 %v299
        %v323 = vunpack.c.h.bf16 %v299
        %v324 = vunpack.c.l.bf16 %v300
        %v325 = vunpack.c.h.bf16 %v300
        %v326 = vunpack.c.l.bf16 %v301
        %v327 = vunpack.c.h.bf16 %v301
        %v328 = vunpack.c.l.bf16 %v302
        %v329 = vunpack.c.h.bf16 %v302
        %v330 = vunpack.c.l.bf16 %v303
        %v331 = vunpack.c.h.bf16 %v303
        %vm336 = vcmask 1046528
        %v337 = vrot.slane %v243, 1
        %v338 = vrot.slane %v244, 1
        %v339 = vsel %vm336, %v337, %v338
        %v340 = vrot.slane %v245, 1
        %v341 = vsel %vm336, %v338, %v340
        %v342 = vrot.slane %v246, 1
        %v343 = vsel %vm336, %v340, %v342
        %vm344 = vcmask 916480
        %v345 = vsel %vm344, %v339, 0
        %v347 = vsel %vm344, %v341, 0
        %v349 = vsel %vm344, %v343, 0
        %v351 = vsel %vm344, %v342, 0
        %353 = vmatprep.subr.mxu0 %v305
        %354 = vmatpush1.msra.mxu0 %v304
        %355 = vmatprep.subr.mxu0 %v307
        %356 = vmatpush1.msra.mxu0 %v306
        %357 = vmatprep.subr.mxu0 %v309
        %358 = vmatpush1.msra.mxu0 %v308
        %359 = vmatprep.subr.mxu0 %v311
        %360 = vmatpush1.msra.mxu0 %v310
        %361 = vmatprep.subr.mxu0 %v313
        %362 = vmatpush1.msra.mxu0 %v312
        %363 = vmatprep.subr.mxu0 %v315
        %364 = vmatpush1.msra.mxu0 %v314
        %365 = vmatprep.subr.mxu0 %v317
        %366 = vmatpush1.msra.mxu0 %v316
        %367 = vmatprep.subr.mxu0 %v319
        %368 = vmatpush1.msra.mxu0 %v318
        %369 = vmatprep.subr.mxu0 %v321
        %370 = vmatpush1.msra.mxu0 %v320
        %371 = vmatprep.subr.mxu0 %v323
        %372 = vmatpush1.msra.mxu0 %v322
        %373 = vmatprep.subr.mxu0 %v325
        %374 = vmatpush1.msra.mxu0 %v324
        %375 = vmatprep.subr.mxu0 %v327
        %376 = vmatpush1.msra.mxu0 %v326
        %377 = vmatprep.subr.mxu0 %v329
        %378 = vmatpush1.msra.mxu0 %v328
        %379 = vmatprep.subr.mxu0 %v331
        %380 = vmatpush1.msra.mxu0 %v330
        %381 = vmatprep.subr.mxu0 0.0
        %382 = vmatpush1.msra.mxu0 0.0
        %383 = vmatprep.subr.mxu0 0.0
        %384 = vmatpush1.msra.mxu0 0.0
        %385 = vmatprep.subr.mxu0 0.0
        %386 = vmatpush1.msra.mxu0 0.0
        %387 = vmatprep.subr.mxu0 0.0
        %388 = vmatpush1.msra.mxu0 0.0
        %389 = vmatprep.subr.mxu0 0.0
        %390 = vmatpush1.msra.mxu0 0.0
        %391 = vmatprep.subr.mxu0 0.0
        %392 = vmatpush1.msra.mxu0 0.0
        %393 = vmatprep.subr.mxu0 0.0
        %394 = vmatpush1.msra.mxu0 0.0
        %395 = vmatprep.subr.mxu0 0.0
        %396 = vmatpush1.msra.mxu0 0.0
        %397 = vmatprep.subr.mxu0 0.0
        %398 = vmatpush1.msra.mxu0 0.0
        %399 = vmatprep.subr.mxu0 0.0
        %400 = vmatpush1.msra.mxu0 0.0
        %401 = vmatprep.subr.mxu0 0.0
        %402 = vmatpush1.msra.mxu0 0.0
        %403 = vmatprep.subr.mxu0 0.0
        %404 = vmatpush1.msra.mxu0 0.0
        %405 = vmatprep.subr.mxu0 0.0
        %406 = vmatpush1.msra.mxu0 0.0
        %407 = vmatprep.subr.mxu0 0.0
        %408 = vmatpush1.msra.mxu0 0.0
        %409 = vmatprep.subr.mxu0 0.0
        %410 = vmatpush1.msra.mxu0 0.0
        %411 = vmatprep.subr.mxu0 0.0
        %412 = vmatpush1.msra.mxu0 0.0
        %413 = vmatprep.subr.mxu0 0.0
        %414 = vmatpush1.msra.mxu0 0.0
        %415 = vmatprep.subr.mxu0 0.0
        %416 = vmatpush1.msra.mxu0 0.0
        %417 = vmatprep.mubr.f32.mxu0 0.0
        %418 = vmatmul.mubr.f32.gmra.mrb[0].mxu0 %v345
        %v419 = vpop.f32.mrb[0].mxu0
        %v420 = vadd.f32 0.0, %v419
        %v421 = vpop.f32.mrb[0].mxu0
        %v422 = vadd.f32 0.0, %v421
        %423 = vmatprep.mubr.f32.mxu0 0.0
        %424 = vmatmul.mubr.f32.gmra.mrb[0].mxu0 %v347
        %v425 = vpop.f32.mrb[0].mxu0
        %v426 = vadd.f32 0.0, %v425
        %v427 = vpop.f32.mrb[0].mxu0
        %v428 = vadd.f32 0.0, %v427
        %429 = vmatprep.mubr.f32.mxu0 0.0
        %430 = vmatmul.mubr.f32.gmra.mrb[0].mxu0 %v349
        %v431 = vpop.f32.mrb[0].mxu0
        %v432 = vadd.f32 0.0, %v431
        %v433 = vpop.f32.mrb[0].mxu0
        %v434 = vadd.f32 0.0, %v433
        %435 = vmatprep.mubr.f32.mxu0 0.0
        %436 = vmatmul.mubr.f32.gmra.mrb[0].mxu0 %v351
        %v437 = vpop.f32.mrb[0].mxu0
        %v438 = vadd.f32 0.0, %v437
        %v439 = vpop.f32.mrb[0].mxu0
        %v440 = vadd.f32 0.0, %v439
        %441 = vdwg.mxu0
        %v442 = vsel %vm344, %v243, 0
        %v444 = vsel %vm344, %v244, 0
        %v446 = vsel %vm344, %v245, 0
        %v448 = vsel %vm344, %v246, 0
        %450 = vmatprep.subr.mxu0 %v262
        %451 = vmatpush1.msra.mxu0 %v261
        %452 = vmatprep.subr.mxu0 %v264
        %453 = vmatpush1.msra.mxu0 %v263
        %454 = vmatprep.subr.mxu0 %v266
        %455 = vmatpush1.msra.mxu0 %v265
        %456 = vmatprep.subr.mxu0 %v268
        %457 = vmatpush1.msra.mxu0 %v267
        %458 = vmatprep.subr.mxu0 %v270
        %459 = vmatpush1.msra.mxu0 %v269
        %460 = vmatprep.subr.mxu0 %v272
        %461 = vmatpush1.msra.mxu0 %v271
        %462 = vmatprep.subr.mxu0 %v274
        %463 = vmatpush1.msra.mxu0 %v273
        %464 = vmatprep.subr.mxu0 %v276
        %465 = vmatpush1.msra.mxu0 %v275
        %466 = vmatprep.subr.mxu0 %v278
        %467 = vmatpush1.msra.mxu0 %v277
        %468 = vmatprep.subr.mxu0 %v280
        %469 = vmatpush1.msra.mxu0 %v279
        %470 = vmatprep.subr.mxu0 %v282
        %471 = vmatpush1.msra.mxu0 %v281
        %472 = vmatprep.subr.mxu0 %v284
        %473 = vmatpush1.msra.mxu0 %v283
        %474 = vmatprep.subr.mxu0 %v286
        %475 = vmatpush1.msra.mxu0 %v285
        %476 = vmatprep.subr.mxu0 %v288
        %477 = vmatpush1.msra.mxu0 %v287
        %478 = vmatprep.subr.mxu0 0.0
        %479 = vmatpush1.msra.mxu0 0.0
        %480 = vmatprep.subr.mxu0 0.0
        %481 = vmatpush1.msra.mxu0 0.0
        %482 = vmatprep.subr.mxu0 0.0
        %483 = vmatpush1.msra.mxu0 0.0
        %484 = vmatprep.subr.mxu0 0.0
        %485 = vmatpush1.msra.mxu0 0.0
        %486 = vmatprep.subr.mxu0 0.0
        %487 = vmatpush1.msra.mxu0 0.0
        %488 = vmatprep.subr.mxu0 0.0
        %489 = vmatpush1.msra.mxu0 0.0
        %490 = vmatprep.subr.mxu0 0.0
        %491 = vmatpush1.msra.mxu0 0.0
        %492 = vmatprep.subr.mxu0 0.0
        %493 = vmatpush1.msra.mxu0 0.0
        %494 = vmatprep.subr.mxu0 0.0
        %495 = vmatpush1.msra.mxu0 0.0
        %496 = vmatprep.subr.mxu0 0.0
        %497 = vmatpush1.msra.mxu0 0.0
        %498 = vmatprep.subr.mxu0 0.0
        %499 = vmatpush1.msra.mxu0 0.0
        %500 = vmatprep.subr.mxu0 0.0
        %501 = vmatpush1.msra.mxu0 0.0
        %502 = vmatprep.subr.mxu0 0.0
        %503 = vmatpush1.msra.mxu0 0.0
        %504 = vmatprep.subr.mxu0 0.0
        %505 = vmatpush1.msra.mxu0 0.0
        %506 = vmatprep.subr.mxu0 0.0
        %507 = vmatpush1.msra.mxu0 0.0
        %508 = vmatprep.subr.mxu0 0.0
        %509 = vmatpush1.msra.mxu0 0.0
        %510 = vmatprep.subr.mxu0 0.0
        %511 = vmatpush1.msra.mxu0 0.0
        %512 = vmatprep.subr.mxu0 0.0
        %513 = vmatpush1.msra.mxu0 0.0
        %514 = vmatprep.mubr.f32.mxu0 0.0
        %515 = vmatmul.mubr.f32.gmra.mrb[0].mxu0 %v442
        %v516 = vpop.f32.mrb[0].mxu0
        %v517 = vadd.f32 %v420, %v516
        %v518 = vpop.f32.mrb[0].mxu0
        %v519 = vadd.f32 %v422, %v518
        %520 = vmatprep.mubr.f32.mxu0 0.0
        %521 = vmatmul.mubr.f32.gmra.mrb[0].mxu0 %v444
        %v522 = vpop.f32.mrb[0].mxu0
        %v523 = vadd.f32 %v426, %v522
        %v524 = vpop.f32.mrb[0].mxu0
        %v525 = vadd.f32 %v428, %v524
        %526 = vmatprep.mubr.f32.mxu0 0.0
        %527 = vmatmul.mubr.f32.gmra.mrb[0].mxu0 %v446
        %v528 = vpop.f32.mrb[0].mxu0
        %v529 = vadd.f32 %v432, %v528
        %v530 = vpop.f32.mrb[0].mxu0
        %v531 = vadd.f32 %v434, %v530
        %532 = vmatprep.mubr.f32.mxu0 0.0
        %533 = vmatmul.mubr.f32.gmra.mrb[0].mxu0 %v448
        %v534 = vpop.f32.mrb[0].mxu0
        %v535 = vadd.f32 %v438, %v534
        %v536 = vpop.f32.mrb[0].mxu0
        %v537 = vadd.f32 %v440, %v536
        %538 = vdwg.mxu0
        %s539 = scalar_lea.vmem [#allocation2], 224
        %v540 = vld [vmem:[%s539] sm:$0xff]
        %v541 = vld [vmem:[%s539 + $0x8] sm:$0xff]
        %v542 = vld [vmem:[%s539 + $0x10] sm:$0xff]
        %v543 = vld [vmem:[%s539 + $0x18] sm:$0xff]
        %v544 = vld [vmem:[%s539 + $0x20] sm:$0xff]
        %v545 = vld [vmem:[%s539 + $0x28] sm:$0xff]
        %v546 = vld [vmem:[%s539 + $0x30] sm:$0xff]
        %v547 = vld [vmem:[%s539 + $0x38] sm:$0xff]
        %v548 = vld [vmem:[%s539 + $0x40] sm:$0xff]
        %v549 = vld [vmem:[%s539 + $0x48] sm:$0xff]
        %v550 = vld [vmem:[%s539 + $0x50] sm:$0xff]
        %v551 = vld [vmem:[%s539 + $0x58] sm:$0xff]
        %v552 = vld [vmem:[%s539 + $0x60] sm:$0xff]
        %v553 = vld [vmem:[%s539 + $0x68] sm:$0xff]
        %v554 = vunpack.c.l.bf16 %v540
        %v555 = vunpack.c.h.bf16 %v540
        %v556 = vunpack.c.l.bf16 %v541
        %v557 = vunpack.c.h.bf16 %v541
        %v558 = vunpack.c.l.bf16 %v542
        %v559 = vunpack.c.h.bf16 %v542
        %v560 = vunpack.c.l.bf16 %v543
        %v561 = vunpack.c.h.bf16 %v543
        %v562 = vunpack.c.l.bf16 %v544
        %v563 = vunpack.c.h.bf16 %v544
        %v564 = vunpack.c.l.bf16 %v545
        %v565 = vunpack.c.h.bf16 %v545
        %v566 = vunpack.c.l.bf16 %v546
        %v567 = vunpack.c.h.bf16 %v546
        %v568 = vunpack.c.l.bf16 %v547
        %v569 = vunpack.c.h.bf16 %v547
        %v570 = vunpack.c.l.bf16 %v548
        %v571 = vunpack.c.h.bf16 %v548
        %v572 = vunpack.c.l.bf16 %v549
        %v573 = vunpack.c.h.bf16 %v549
        %v574 = vunpack.c.l.bf16 %v550
        %v575 = vunpack.c.h.bf16 %v550
        %v576 = vunpack.c.l.bf16 %v551
        %v577 = vunpack.c.h.bf16 %v551
        %v578 = vunpack.c.l.bf16 %v552
        %v579 = vunpack.c.h.bf16 %v552
        %v580 = vunpack.c.l.bf16 %v553
        %v581 = vunpack.c.h.bf16 %v553
        %vm582 = vcmask 1045504
        %v583 = vrot.slane %v243, 2
        %v584 = vrot.slane %v244, 2
        %v585 = vsel %vm582, %v583, %v584
        %v586 = vrot.slane %v245, 2
        %v587 = vsel %vm582, %v584, %v586
        %v588 = vrot.slane %v246, 2
        %v589 = vsel %vm582, %v586, %v588
        %v590 = vsel %vm344, %v585, 0
        %v592 = vsel %vm344, %v587, 0
        %v594 = vsel %vm344, %v589, 0
        %v596 = vsel %vm344, %v588, 0
        %598 = vmatprep.subr.mxu0 %v555
        %599 = vmatpush1.msra.mxu0 %v554
        %600 = vmatprep.subr.mxu0 %v557
        %601 = vmatpush1.msra.mxu0 %v556
        %602 = vmatprep.subr.mxu0 %v559
        %603 = vmatpush1.msra.mxu0 %v558
        %604 = vmatprep.subr.mxu0 %v561
        %605 = vmatpush1.msra.mxu0 %v560
        %606 = vmatprep.subr.mxu0 %v563
        %607 = vmatpush1.msra.mxu0 %v562
        %608 = vmatprep.subr.mxu0 %v565
        %609 = vmatpush1.msra.mxu0 %v564
        %610 = vmatprep.subr.mxu0 %v567
        %611 = vmatpush1.msra.mxu0 %v566
        %612 = vmatprep.subr.mxu0 %v569
        %613 = vmatpush1.msra.mxu0 %v568
        %614 = vmatprep.subr.mxu0 %v571
        %615 = vmatpush1.msra.mxu0 %v570
        %616 = vmatprep.subr.mxu0 %v573
        %617 = vmatpush1.msra.mxu0 %v572
        %618 = vmatprep.subr.mxu0 %v575
        %619 = vmatpush1.msra.mxu0 %v574
        %620 = vmatprep.subr.mxu0 %v577
        %621 = vmatpush1.msra.mxu0 %v576
        %622 = vmatprep.subr.mxu0 %v579
        %623 = vmatpush1.msra.mxu0 %v578
        %624 = vmatprep.subr.mxu0 %v581
        %625 = vmatpush1.msra.mxu0 %v580
        %626 = vmatprep.subr.mxu0 0.0
        %627 = vmatpush1.msra.mxu0 0.0
        %628 = vmatprep.subr.mxu0 0.0
        %629 = vmatpush1.msra.mxu0 0.0
        %630 = vmatprep.subr.mxu0 0.0
        %631 = vmatpush1.msra.mxu0 0.0
        %632 = vmatprep.subr.mxu0 0.0
        %633 = vmatpush1.msra.mxu0 0.0
        %634 = vmatprep.subr.mxu0 0.0
        %635 = vmatpush1.msra.mxu0 0.0
        %636 = vmatprep.subr.mxu0 0.0
        %637 = vmatpush1.msra.mxu0 0.0
        %638 = vmatprep.subr.mxu0 0.0
        %639 = vmatpush1.msra.mxu0 0.0
        %640 = vmatprep.subr.mxu0 0.0
        %641 = vmatpush1.msra.mxu0 0.0
        %642 = vmatprep.subr.mxu0 0.0
        %643 = vmatpush1.msra.mxu0 0.0
        %644 = vmatprep.subr.mxu0 0.0
        %645 = vmatpush1.msra.mxu0 0.0
        %646 = vmatprep.subr.mxu0 0.0
        %647 = vmatpush1.msra.mxu0 0.0
        %648 = vmatprep.subr.mxu0 0.0
        %649 = vmatpush1.msra.mxu0 0.0
        %650 = vmatprep.subr.mxu0 0.0
        %651 = vmatpush1.msra.mxu0 0.0
        %652 = vmatprep.subr.mxu0 0.0
        %653 = vmatpush1.msra.mxu0 0.0
        %654 = vmatprep.subr.mxu0 0.0
        %655 = vmatpush1.msra.mxu0 0.0
        %656 = vmatprep.subr.mxu0 0.0
        %657 = vmatpush1.msra.mxu0 0.0
        %658 = vmatprep.subr.mxu0 0.0
        %659 = vmatpush1.msra.mxu0 0.0
        %660 = vmatprep.subr.mxu0 0.0
        %661 = vmatpush1.msra.mxu0 0.0
        %662 = vmatprep.mubr.f32.mxu0 0.0
        %663 = vmatmul.mubr.f32.gmra.mrb[0].mxu0 %v590
        %v664 = vpop.f32.mrb[0].mxu0
        %v665 = vadd.f32 0.0, %v664
        %v666 = vpop.f32.mrb[0].mxu0
        %v667 = vadd.f32 0.0, %v666
        %668 = vmatprep.mubr.f32.mxu0 0.0
        %669 = vmatmul.mubr.f32.gmra.mrb[0].mxu0 %v592
        %v670 = vpop.f32.mrb[0].mxu0
        %v671 = vadd.f32 0.0, %v670
        %v672 = vpop.f32.mrb[0].mxu0
        %v673 = vadd.f32 0.0, %v672
        %674 = vmatprep.mubr.f32.mxu0 0.0
        %675 = vmatmul.mubr.f32.gmra.mrb[0].mxu0 %v594
        %v676 = vpop.f32.mrb[0].mxu0
        %v677 = vadd.f32 0.0, %v676
        %v678 = vpop.f32.mrb[0].mxu0
        %v679 = vadd.f32 0.0, %v678
        %680 = vmatprep.mubr.f32.mxu0 0.0
        %681 = vmatmul.mubr.f32.gmra.mrb[0].mxu0 %v596
        %v682 = vpop.f32.mrb[0].mxu0
        %v683 = vadd.f32 0.0, %v682
        %v684 = vpop.f32.mrb[0].mxu0
        %v685 = vadd.f32 0.0, %v684
        %686 = vdwg.mxu0
        %v687 = vadd.f32 %v517, %v665
        %v688 = vadd.f32 %v519, %v667
        %v689 = vadd.f32 %v523, %v671
        %v690 = vadd.f32 %v525, %v673
        %v691 = vadd.f32 %v529, %v677
        %v692 = vadd.f32 %v531, %v679
        %v693 = vadd.f32 %v535, %v683
        %v694 = vadd.f32 %v537, %v685
        %v695 = vld [vmem:[%s2] sm:$0x3]
        %v697 = vlaneseq
        %v698 = vshrl.u32 %v697, 7
        %v699 = vsub.s32 0, %v698
        %v700 = vrot.slane %v695, %v699
        %v701 = vlaneseq
        %v702 = vshrl.u32 %v701, 7
        %v703 = vsub.s32 1, %v702
        %v704 = vrot.slane %v695, %v703
        %v707 = vadd.f32 %v687, %v700
        %v708 = vadd.f32 %v688, %v704
        %v709 = vadd.f32 %v689, %v700
        %v710 = vadd.f32 %v690, %v704
        %v711 = vadd.f32 %v691, %v700
        %v712 = vadd.f32 %v692, %v704
        %v713 = vadd.f32 %v693, %v700
        %v714 = vadd.f32 %v694, %v704
        %v717 = vrot.slane %v707, 1
        %v718 = vrot.slane %v708, 1
        %v721 = vmax.f32 %v707, %v717
        %v722 = vmax.f32 %v708, %v718
        %v725 = vrot.slane %v709, 1
        %v726 = vrot.slane %v710, 1
        %v729 = vmax.f32 %v709, %v725
        %v730 = vmax.f32 %v710, %v726
        %v733 = vrot.slane %v711, 1
        %v734 = vrot.slane %v712, 1
        %v737 = vmax.f32 %v711, %v733
        %v738 = vmax.f32 %v712, %v734
        %v741 = vrot.slane %v713, 1
        %v742 = vrot.slane %v714, 1
        %v745 = vmax.f32 %v713, %v741
        %v746 = vmax.f32 %v714, %v742
        %v749 = vrot.slane %v721, 1
        %v750 = vrot.slane %v722, 1
        %v753 = vrot.slane %v721, 2
        %v754 = vrot.slane %v722, 2
        %v757 = vrot.slane %v721, 3
        %v758 = vrot.slane %v722, 3
        %v763 = vrot.slane %v729, 4
        %v764 = vrot.slane %v730, 4
        %v767 = vrot.slane %v729, 5
        %v768 = vrot.slane %v730, 5
        %v771 = vrot.slane %v729, 6
        %v772 = vrot.slane %v730, 6
        %v775 = vrot.slane %v729, 7
        %v776 = vrot.slane %v730, 7
        %v781 = vrot.slane %v737, 1
        %v782 = vrot.slane %v738, 1
        %v785 = vrot.slane %v737, 2
        %v786 = vrot.slane %v738, 2
        %v789 = vrot.slane %v737, 3
        %v790 = vrot.slane %v738, 3
        %v795 = vrot.slane %v745, 4
        %v796 = vrot.slane %v746, 4
        %v799 = vrot.slane %v745, 5
        %v800 = vrot.slane %v746, 5
        %vm803 = vcmask 1040384
        %v804 = vsel %vm803, %v721, %v749
        %v805 = vsel %vm803, %v722, %v750
        %vm806 = vcmask 1041408
        %v807 = vsel %vm806, %v804, %v753
        %v808 = vsel %vm806, %v805, %v754
        %vm809 = vcmask 1042432
        %v810 = vsel %vm809, %v807, %v757
        %v811 = vsel %vm809, %v808, %v758
        %vm812 = vcmask 1043456
        %v813 = vsel %vm812, %v810, %v763
        %v814 = vsel %vm812, %v811, %v764
        %vm815 = vcmask 1044480
        %v816 = vsel %vm815, %v813, %v767
        %v817 = vsel %vm815, %v814, %v768
        %v818 = vsel %vm582, %v816, %v771
        %v819 = vsel %vm582, %v817, %v772
        %v820 = vsel %vm336, %v818, %v775
        %v821 = vsel %vm336, %v819, %v776
        %v822 = vsel %vm803, %v737, %v781
        %v823 = vsel %vm803, %v738, %v782
        %v824 = vsel %vm806, %v822, %v785
        %v825 = vsel %vm806, %v823, %v786
        %v826 = vsel %vm809, %v824, %v789
        %v827 = vsel %vm809, %v825, %v790
        %v828 = vsel %vm812, %v826, %v795
        %v829 = vsel %vm812, %v827, %v796
        %v830 = vsel %vm815, %v828, %v799
        %v831 = vsel %vm815, %v829, %v800
        %836 = vrot.lane.b32.xlu0 %v820, 120
        %v837 = vpop.permute.xlu0 %836
        %838 = vrot.lane.b32.xlu0 %v821, 120
        %v839 = vpop.permute.xlu0 %838
        %840 = vrot.lane.b32.xlu0 %v830, 120
        %v841 = vpop.permute.xlu0 %840
        %842 = vrot.lane.b32.xlu0 %v831, 120
        %v843 = vpop.permute.xlu0 %842
        %vm844 = vcmask 982016
        %v845 = vsel %vm844, %v837, %v839
        %v846 = vsel %vm844, %v841, %v843
        %851 = vrot.lane.b32.xlu0 %v820, 88
        %v852 = vpop.permute.xlu0 %851
        %853 = vrot.lane.b32.xlu0 %v830, 88
        %v854 = vpop.permute.xlu0 %853
        %vm857 = vcmask 719872
        %v858 = vsel %vm857, %v839, %v852
        %v859 = vsel %vm857, %v843, %v854
        %v860 = vmax.f32 %v820, %v845
        %v861 = vmax.f32 %v821, %v858
        %v862 = vmax.f32 %v830, %v846
        %v863 = vmax.f32 %v831, %v859
        %v864 = vmax.f32 %v860, 0.0
        %v865 = vmax.f32 %v861, 0.0
        %v866 = vmax.f32 %v862, 0.0
        %v867 = vmax.f32 %v863, 0.0
        %v868 = vld [vmem:[%s3] sm:$0x3]
        %v870 = vlaneseq
        %v871 = vshrl.u32 %v870, 7
        %v872 = vsub.s32 0, %v871
        %v873 = vrot.slane %v868, %v872
        %v874 = vlaneseq
        %v875 = vshrl.u32 %v874, 7
        %v876 = vsub.s32 1, %v875
        %v877 = vrot.slane %v868, %v876
        %v880 = vmul.f32 %v864, %v873
        %v881 = vmul.f32 %v865, %v877
        %v882 = vmul.f32 %v866, %v873
        %v883 = vmul.f32 %v867, %v877
        %v884 = vld [vmem:[%s4] sm:$0x3]
        %v886 = vlaneseq
        %v887 = vshrl.u32 %v886, 7
        %v888 = vsub.s32 0, %v887
        %v889 = vrot.slane %v884, %v888
        %v890 = vlaneseq
        %v891 = vshrl.u32 %v890, 7
        %v892 = vsub.s32 1, %v891
        %v893 = vrot.slane %v884, %v892
        %v896 = vadd.f32 %v880, %v889
        %v897 = vadd.f32 %v881, %v893
        %v898 = vadd.f32 %v882, %v889
        %v899 = vadd.f32 %v883, %v893
        %vm900 = vcmask 785412
        %vm901 = vmor %vm900, %vm812
        %902 = vst.msk [vmem:[%s232] sm:$0xff] %vm901, 0
        %903 = vst.msk [vmem:[%s232 + $0x8] sm:$0xff] %vm901, 0
        %v904 = vpack.c.bf16 %v898, %v896
        %v905 = vpack.c.bf16 %v899, %v897
        %v908 = vunpack.c.l.b16 %v904
        %v909 = vunpack.c.l.b16 %v905
        %v910 = vunpack.c.h.b16 %v904
        %v911 = vunpack.c.h.b16 %v905
        %v912 = vpack.c.b16 %v909, %v908
        %v913 = vpack.c.b16 %v911, %v910
        %vm914 = vsmask.f32 256
        %vm915 = vsmask.f32 4368
        %vm916 = vmor %vm914, %vm915
        %v918 = vshrl.u32 %v912, 16
        %v920 = vrot.slane %v918, 7
        %v921 = vshll.u32 %v912, 16
        %v923 = vor.u32 %v920, %v921
        %v924 = vrot.slane %v920, 4
        %v926 = vshrl.u32 %v913, 16
        %v928 = vrot.slane %v926, 7
        %v929 = vshll.u32 %v913, 16
        %v931 = vor.u32 %v928, %v929
        %v932 = vsel %vm916, %v924, %v931
        %vm935 = vcmask 1043456
        %vm936 = vsmask.f32 7938
        %vm937 = vmand %vm935, %vm936
        %vm938 = vcmask 785412
        %vm939 = vsmask.f32 7954
        %vm940 = vmand %vm938, %vm939
        %vm941 = vmor %vm940, %vm937
        %v942 = vld [vmem:[%s232] sm:$0xff]
        %v943 = vsel %vm941, %v923, %v942
        %944 = vst [vmem:[%s232] sm:$0xff] %v943
        %vm945 = vsmask.f32 3328
        %vm946 = vmand %vm935, %vm945
        %vm947 = vsmask.f32 7424
        %vm948 = vmand %vm938, %vm947
        %vm949 = vmor %vm948, %vm946
        %v950 = vld [vmem:[%s232 + $0x8] sm:$0xff]
        %v951 = vsel %vm949, %v932, %v950
        %952 = vst [vmem:[%s232 + $0x8] sm:$0xff] %v951
        %s953 = sand.u32 %s138, 1
        %s954 = scalar_lea.sflag [#allocation4], %s953
        %s955 = sand.u32 %s138, 1
        %s956 = smul.addr %s955, 16
        %s957 = scalar_lea.vmem [#allocation5], %s956
        // Predicated region
        $region45: #{tpu_custom_call.1} parent=39 // pred_check
          %p958 = pneg %p148
        $region46: #{tpu_custom_call.1} parent=39 // pred_check_branch
          %960 = sbr.rel (%p958) target = $region48
        $region47: #{tpu_custom_call.1} parent=39 // pred_region
          %s962 = ssub.s32 256, 256
          %963 = vsyncadd %s954, %s962
          %s964 = smul.addr %s20, 4
          %s965 = smul.addr %s964, 64
          %s966 = scalar_lea.hbm %s5, %s965
          %s967 = sshll.u32 %s957, 4
          %s968 = int_to_ptr.vmem [resolvable:$true] %s967
          %973 = dma.vmem_to_hbm [thread:$0]  %s968, 256, %s966, %s954, 128, 128, 8
        $region48: #{tpu_custom_call.1} parent=39 // pred_fallthru
          _
      $region40: #{tpu_custom_call.1} parent=5 // pred_fallthru
        _
      %p974 = scmp.le.s32.totalorder 2, %s15
      // Predicated region
      $region49: #{tpu_custom_call.1} parent=5 // pred_check
        %p975 = pneg %p974
      $region50: #{tpu_custom_call.1} parent=5 // pred_check_branch
        %977 = sbr.rel (%p975) target = $region52
      $region51: #{tpu_custom_call.1} parent=5 // pred_region
        %s978 = ssub.s32 %s15, 2
        // Predicated region
        $region53: #{tpu_custom_call.1} parent=51 // pred_check
          %p979 = pneg %p154
        $region54: #{tpu_custom_call.1} parent=51 // pred_check_branch
          %981 = sbr.rel (%p979) target = $region56
        $region55: #{tpu_custom_call.1} parent=51 // pred_region
          %s982 = sand.u32 %s139, 1
          %s983 = scalar_lea.sflag [#allocation4], %s982
          %s984 = sand.u32 %s139, 1
          %s985 = smul.addr %s984, 16
          %s986 = scalar_lea.vmem [#allocation5], %s985
          %987 = dma.done %s983, 256
        $region56: #{tpu_custom_call.1} parent=51 // pred_fallthru
          _
      $region52: #{tpu_custom_call.1} parent=5 // pred_fallthru
        _
    $region6: #{tpu_custom_call.1} parent=1 // loop_footer
      %s19 = sadd.s32 1, %s15
    $region7: #{tpu_custom_call.1} parent=1 // loop_footer_branch
      %14 = sbr.rel target = $region3
    $region8: #{tpu_custom_call.1} parent=1 // loop_exit
      _
    %988 = vsyncpa [#allocation3], 1
    %s989 = scalar_lea.sflag [#allocation3], 1
    %990 = vsyncpa %s989, 1
    %991 = vsyncpa [#allocation4], 1
    %s992 = scalar_lea.sflag [#allocation4], 1
    %993 = vsyncpa %s992, 1

</llo_original>
